<compile_context>
chip_gen: v5e
topology: v5e:2x2
jax: 0.10.0
libtpu: 0.0.40
codegen_flags: <defaults>
</compile_context>

<pallas_src>
import functools

import jax
import jax.numpy as jnp
from jax.experimental import pallas as pl
from jax.experimental.pallas import tpu as pltpu


def _round_up(x, m):
    return (x + m - 1) // m * m


# ------------------------------ Pallas kernel ------------------------------ #

def _make_block_kernel(cin, planes, wp, w_orig, out_len, out_len_r, tap_offsets):
    """Fused BasicBlock kernel for one image (stride=1, inplanes == planes).

    Refs per grid step:
      x_ref  : (Cin, Lpad)        bf16  zero-padded, row-major flattened image
      w1_ref : (planes, 9*Cin)    bf16  BN1 scale folded in, rows match im2col order
      b1_ref : (planes, 1)        f32   folded BN1 bias
      w2_ref : (planes, 9*planes) bf16  BN2 scale folded in
      b2_ref : (planes, 1)        f32   folded BN2 bias
      o_ref  : (planes, out_len_r)  f32 lane-dense output tile (lane axis = spatial)
      col_ref: (9*planes, out_len_r) bf16 VMEM im2col scratch (reused by both convs)
      mid_ref: (planes, Lpad)     bf16  VMEM staging of conv1 output in padded layout
    """
    res_off = wp + 1   # centre tap: interior pixel (y, x) lives at (y+1)*wp + (x+1)

    def kernel(x_ref, w1_ref, b1_ref, w2_ref, b2_ref, o_ref, col_ref, mid_ref):
        # ---- conv1 + bn1 + relu: in-VMEM im2col, single big-K MXU matmul ----
        for t, off in enumerate(tap_offsets):
            col_ref[t * cin:(t + 1) * cin, :] = x_ref[:, off:off + out_len_r]
        h1 = jnp.dot(w1_ref[...], col_ref[...], preferred_element_type=jnp.float32)
        h1 = jnp.maximum(h1 + b1_ref[...], 0.0)

        # Zero the junk columns (flattened-padding wrap-around) and the 128-rounding
        # tail so conv2 sees a proper zero halo around the intermediate activation.
        lane = jax.lax.broadcasted_iota(jnp.int32, h1.shape, 1)
        valid = ((lane % wp) < w_orig) & (lane < out_len)
        h1 = jnp.where(valid, h1, 0.0).astype(mid_ref.dtype)

        # Stage into the padded layout entirely in VMEM (no HBM round trip).
        mid_ref[...] = jnp.zeros_like(mid_ref)
        mid_ref[:, res_off:res_off + out_len_r] = h1

        # ---- conv2 + bn2 + residual + relu ----
        for t, off in enumerate(tap_offsets):
            col_ref[t * planes:(t + 1) * planes, :] = mid_ref[:, off:off + out_len_r]
        h2 = jnp.dot(w2_ref[...], col_ref[...], preferred_element_type=jnp.float32)
        h2 = (h2 + b2_ref[...]
              + x_ref[:, res_off:res_off + out_len_r].astype(jnp.float32))
        o_ref[...] = jnp.maximum(h2, 0.0).astype(o_ref.dtype)

    return kernel


# ------------------------------- Glue (JAX) -------------------------------- #

def _fold_bn(gamma, beta, mean, var, eps=1e-5):
    scale = gamma / jnp.sqrt(var + eps)
    bias = beta - mean * scale
    return scale, bias


def _prep_weight(w_oihw, scale):
    """(Cout, Cin, 3, 3) * per-Cout BN scale -> (Cout, 9*Cin) bf16.

    Row ordering of the K axis is (tap, channel) = (dy*3+dx)*Cin + c, matching the
    in-kernel im2col layout.
    """
    cout, cin = w_oihw.shape[0], w_oihw.shape[1]
    wf = w_oihw * scale[:, None, None, None]
    return jnp.transpose(wf, (0, 2, 3, 1)).reshape(cout, 9 * cin).astype(jnp.bfloat16)


def _pad_flat(x_nchw, lpad):
    """(N, C, H, W) -> (N, C, lpad): conv halo + safety rows, flattened row-major,
    then zero-extended so all tap reads of the 128-rounded output window are in
    bounds and the lane dim is a multiple of 128."""
    n, c, h, w = x_nchw.shape
    xp = jnp.pad(x_nchw, ((0, 0), (0, 0), (1, 2), (1, 1)))
    flat = xp.reshape(n, c, (h + 3) * (w + 2))
    return jnp.pad(flat, ((0, 0), (0, 0), (0, lpad - flat.shape[-1])))


def basic_block_forward(x_nchw, params):
    """BasicBlock forward (stride=1, downsample=None). NCHW in, NCHW out (f32)."""
    N, C, H, W = x_nchw.shape
    planes = params["w1"].shape[0]
    assert C == planes, "downsample is None -> inplanes must equal planes"
    # TODO(synk): stride>1 / downsample BasicBlocks and the rest of ResNetImageNet
    # (7x7 stem conv, maxpool, avgpool, fc, sigmoid) are not covered here.

    wp = W + 2
    out_len = H * wp                          # true flattened output extent
    out_len_r = _round_up(out_len, 128)       # lane-dense (unmasked-store) extent
    lpad = _round_up(max((H + 3) * wp, out_len_r + 2 * wp + 2), 128)

    s1, b1 = _fold_bn(params["bn1_gamma"], params["bn1_beta"],
                      params["bn1_mean"], params["bn1_var"])
    s2, b2 = _fold_bn(params["bn2_gamma"], params["bn2_beta"],
                      params["bn2_mean"], params["bn2_var"])
    w1m = _prep_weight(params["w1"], s1)              # (planes, 9*C)      bf16
    w2m = _prep_weight(params["w2"], s2)              # (planes, 9*planes) bf16
    b1c = b1.reshape(planes, 1).astype(jnp.float32)
    b2c = b2.reshape(planes, 1).astype(jnp.float32)

    x_pf = _pad_flat(x_nchw.astype(jnp.bfloat16), lpad)

    tap_offsets = tuple(dy * wp + dx for dy in range(3) for dx in range(3))
    kernel = _make_block_kernel(C, planes, wp, W, out_len, out_len_r, tap_offsets)

    # VMEM working set (double-buffered inputs/output + scratch); cap at 48 MiB so
    # the same setting is safe on v7x (64 MiB physical) and generous on v5e/v6e.
    need = (2 * C * lpad * 2
            + 2 * (planes * 9 * C * 2 + planes * 9 * planes * 2 + 2 * planes * 4)
            + 2 * planes * out_len_r * 4
            + 9 * planes * out_len_r * 2
            + planes * lpad * 2)
    vmem_limit = min(max(need + (8 << 20), 32 << 20), 48 << 20)

    out_ext = pl.pallas_call(
        kernel,
        out_shape=jax.ShapeDtypeStruct((N, planes, out_len_r), jnp.float32),
        grid_spec=pltpu.PrefetchScalarGridSpec(
            num_scalar_prefetch=0,
            grid=(N,),
            in_specs=[
                pl.BlockSpec((None, C, lpad), lambda n: (n, 0, 0)),
                pl.BlockSpec((planes, 9 * C), lambda n: (0, 0)),
                pl.BlockSpec((planes, 1), lambda n: (0, 0)),
                pl.BlockSpec((planes, 9 * planes), lambda n: (0, 0)),
                pl.BlockSpec((planes, 1), lambda n: (0, 0)),
            ],
            out_specs=pl.BlockSpec((None, planes, out_len_r), lambda n: (n, 0, 0)),
            scratch_shapes=[
                pltpu.VMEM((9 * planes, out_len_r), jnp.bfloat16),   # im2col
                pltpu.VMEM((planes, lpad), jnp.bfloat16),            # conv1 staging
            ]),
        compiler_params=pltpu.CompilerParams(
            dimension_semantics=("parallel",),
            vmem_limit_bytes=int(vmem_limit)),
    )(x_pf, w1m, b1c, w2m, b2c)

    # TODO(synk): for small-spatial / large-channel layers (14x14, 7x7) pack several
    # images per grid step along the lane axis and tile Cout for weight reuse.
    out = out_ext[:, :, :out_len].reshape(N, planes, H, wp)[:, :, :, :W]
    return out


# --------------------------- Pure-JAX reference ----------------------------- #

def _reference_forward(x_nchw, params):
    bf = lambda a: a.astype(jnp.bfloat16).astype(jnp.float32)
    s1, b1 = _fold_bn(params["bn1_gamma"], params["bn1_beta"],
                      params["bn1_mean"], params["bn1_var"])
    s2, b2 = _fold_bn(params["bn2_gamma"], params["bn2_beta"],
                      params["bn2_mean"], params["bn2_var"])
    w1 = bf(params["w1"] * s1[:, None, None, None])
    w2 = bf(params["w2"] * s2[:, None, None, None])
    xb = bf(x_nchw)

    conv = functools.partial(jax.lax.conv_general_dilated,
                             window_strides=(1, 1), padding="SAME",
                             dimension_numbers=("NCHW", "OIHW", "NCHW"),
                             precision=jax.lax.Precision.HIGHEST)
    out1 = jnp.maximum(conv(xb, w1) + b1[None, :, None, None], 0.0)
    out1 = bf(out1)   # mirrors the bf16 storage of the intermediate activation
    out2 = jnp.maximum(conv(out1, w2) + b2[None, :, None, None] + xb, 0.0)
    return out2


# ----------------------------------- Main ----------------------------------- #

if __name__ == "__main__":
    key = jax.random.PRNGKey(0)
    N, C, H, W = 2, 8, 16, 16          # inplanes == planes == 8, stride = 1
    planes = C

    ks = jax.random.split(key, 8)
    x = jax.random.normal(ks[0], (N, C, H, W), dtype=jnp.float32)

    params = {
        "w1": 0.1 * jax.random.normal(ks[1], (planes, C, 3, 3), dtype=jnp.float32),
        "w2": 0.1 * jax.random.normal(ks[2], (planes, planes, 3, 3), dtype=jnp.float32),
        "bn1_gamma": 1.0 + 0.1 * jax.random.normal(ks[3], (planes,), dtype=jnp.float32),
        "bn1_beta": 0.1 * jax.random.normal(ks[4], (planes,), dtype=jnp.float32),
        "bn1_mean": 0.05 * jax.random.normal(ks[5], (planes,), dtype=jnp.float32),
        "bn1_var": jnp.abs(1.0 + 0.1 * jax.random.normal(ks[6], (planes,), dtype=jnp.float32)),
        "bn2_gamma": 1.0 + 0.1 * jax.random.normal(ks[7], (planes,), dtype=jnp.float32),
        "bn2_beta": jnp.linspace(-0.1, 0.1, planes, dtype=jnp.float32),
        "bn2_mean": jnp.linspace(-0.05, 0.05, planes, dtype=jnp.float32),
        "bn2_var": jnp.linspace(0.9, 1.1, planes, dtype=jnp.float32),
    }

    fwd = jax.jit(basic_block_forward)
    out = fwd(x, params)
    jax.block_until_ready(out)

    ref = _reference_forward(x, params)
    assert out.shape == (N, planes, H, W)
    max_err = float(jnp.max(jnp.abs(out - ref)))
    assert max_err < 1e-2, f"mismatch vs reference (max abs err {max_err})"

    print("KERNEL_OK")
</pallas_src>

<mosaic_0001>
module attributes {stable_mosaic.version = 11 : i64} {
  func.func @kernel(%arg0: i32, %arg1: memref<1x8x512xbf16, #tpu.memory_space<vmem>>, %arg2: memref<8x72xbf16, #tpu.memory_space<vmem>>, %arg3: memref<8x1xf32, #tpu.memory_space<vmem>>, %arg4: memref<8x72xbf16, #tpu.memory_space<vmem>>, %arg5: memref<8x1xf32, #tpu.memory_space<vmem>>, %arg6: memref<1x8x384xf32, #tpu.memory_space<vmem>>, %arg7: memref<72x384xbf16, #tpu.memory_space<vmem>>, %arg8: memref<8x512xbf16, #tpu.memory_space<vmem>>) attributes {dimension_semantics = [#tpu.dimension_semantics<parallel>], iteration_bounds = array<i64: 2>, scalar_prefetch = 0 : i64, scratch_operands = 2 : i64, tpu.core_type = #tpu.core_type<tc>, window_params = [{transform_indices = @transform_0, window_bounds = array<i64: 1, 8, 512>}, {pipeline_mode = #tpu.pipeline_mode<synchronous>, transform_indices = @transform_1, window_bounds = array<i64: 8, 72>}, {pipeline_mode = #tpu.pipeline_mode<synchronous>, transform_indices = @transform_2, window_bounds = array<i64: 8, 1>}, {pipeline_mode = #tpu.pipeline_mode<synchronous>, transform_indices = @transform_3, window_bounds = array<i64: 8, 72>}, {pipeline_mode = #tpu.pipeline_mode<synchronous>, transform_indices = @transform_4, window_bounds = array<i64: 8, 1>}, {transform_indices = @transform_5, window_bounds = array<i64: 1, 8, 384>}]} {
    %c0 = arith.constant 0 : index
    %c0_0 = arith.constant 0 : index
    %c0_1 = arith.constant 0 : index
    %0 = vector.load %arg1[%c0, %c0_0, %c0_1] : memref<1x8x512xbf16, #tpu.memory_space<vmem>>, vector<1x8x384xbf16>
    %1 = vector.shape_cast %0 : vector<1x8x384xbf16> to vector<8x384xbf16>
    %c0_2 = arith.constant 0 : index
    %c0_3 = arith.constant 0 : index
    %2 = vector.load %arg7[%c0_2, %c0_3] : memref<72x384xbf16, #tpu.memory_space<vmem>>, vector<8x384xbf16>
    tpu.vector_store %arg7[%c0_2, %c0_3], %1 {strides = array<i32>} : memref<72x384xbf16, #tpu.memory_space<vmem>>, vector<8x384xbf16>,
    %c0_4 = arith.constant 0 : index
    %c0_5 = arith.constant 0 : index
    %c1 = arith.constant 1 : index
    %3 = vector.load %arg1[%c0_4, %c0_5, %c1] : memref<1x8x512xbf16, #tpu.memory_space<vmem>>, vector<1x8x384xbf16>
    %4 = vector.shape_cast %3 : vector<1x8x384xbf16> to vector<8x384xbf16>
    %c8 = arith.constant 8 : index
    %c0_6 = arith.constant 0 : index
    %5 = vector.load %arg7[%c8, %c0_6] : memref<72x384xbf16, #tpu.memory_space<vmem>>, vector<8x384xbf16>
    tpu.vector_store %arg7[%c8, %c0_6], %4 {strides = array<i32>} : memref<72x384xbf16, #tpu.memory_space<vmem>>, vector<8x384xbf16>,
    %c0_7 = arith.constant 0 : index
    %c0_8 = arith.constant 0 : index
    %c2 = arith.constant 2 : index
    %6 = vector.load %arg1[%c0_7, %c0_8, %c2] : memref<1x8x512xbf16, #tpu.memory_space<vmem>>, vector<1x8x384xbf16>
    %7 = vector.shape_cast %6 : vector<1x8x384xbf16> to vector<8x384xbf16>
    %c16 = arith.constant 16 : index
    %c0_9 = arith.constant 0 : index
    %8 = vector.load %arg7[%c16, %c0_9] : memref<72x384xbf16, #tpu.memory_space<vmem>>, vector<8x384xbf16>
    tpu.vector_store %arg7[%c16, %c0_9], %7 {strides = array<i32>} : memref<72x384xbf16, #tpu.memory_space<vmem>>, vector<8x384xbf16>,
    %c0_10 = arith.constant 0 : index
    %c0_11 = arith.constant 0 : index
    %c18 = arith.constant 18 : index
    %9 = vector.load %arg1[%c0_10, %c0_11, %c18] : memref<1x8x512xbf16, #tpu.memory_space<vmem>>, vector<1x8x384xbf16>
    %10 = vector.shape_cast %9 : vector<1x8x384xbf16> to vector<8x384xbf16>
    %c24 = arith.constant 24 : index
    %c0_12 = arith.constant 0 : index
    %11 = vector.load %arg7[%c24, %c0_12] : memref<72x384xbf16, #tpu.memory_space<vmem>>, vector<8x384xbf16>
    tpu.vector_store %arg7[%c24, %c0_12], %10 {strides = array<i32>} : memref<72x384xbf16, #tpu.memory_space<vmem>>, vector<8x384xbf16>,
    %c0_13 = arith.constant 0 : index
    %c0_14 = arith.constant 0 : index
    %c19 = arith.constant 19 : index
    %12 = vector.load %arg1[%c0_13, %c0_14, %c19] : memref<1x8x512xbf16, #tpu.memory_space<vmem>>, vector<1x8x384xbf16>
    %13 = vector.shape_cast %12 : vector<1x8x384xbf16> to vector<8x384xbf16>
    %c32 = arith.constant 32 : index
    %c0_15 = arith.constant 0 : index
    %14 = vector.load %arg7[%c32, %c0_15] : memref<72x384xbf16, #tpu.memory_space<vmem>>, vector<8x384xbf16>
    tpu.vector_store %arg7[%c32, %c0_15], %13 {strides = array<i32>} : memref<72x384xbf16, #tpu.memory_space<vmem>>, vector<8x384xbf16>,
    %c0_16 = arith.constant 0 : index
    %c0_17 = arith.constant 0 : index
    %c20 = arith.constant 20 : index
    %15 = vector.load %arg1[%c0_16, %c0_17, %c20] : memref<1x8x512xbf16, #tpu.memory_space<vmem>>, vector<1x8x384xbf16>
    %16 = vector.shape_cast %15 : vector<1x8x384xbf16> to vector<8x384xbf16>
    %c40 = arith.constant 40 : index
    %c0_18 = arith.constant 0 : index
    %17 = vector.load %arg7[%c40, %c0_18] : memref<72x384xbf16, #tpu.memory_space<vmem>>, vector<8x384xbf16>
    tpu.vector_store %arg7[%c40, %c0_18], %16 {strides = array<i32>} : memref<72x384xbf16, #tpu.memory_space<vmem>>, vector<8x384xbf16>,
    %c0_19 = arith.constant 0 : index
    %c0_20 = arith.constant 0 : index
    %c36 = arith.constant 36 : index
    %18 = vector.load %arg1[%c0_19, %c0_20, %c36] : memref<1x8x512xbf16, #tpu.memory_space<vmem>>, vector<1x8x384xbf16>
    %19 = vector.shape_cast %18 : vector<1x8x384xbf16> to vector<8x384xbf16>
    %c48 = arith.constant 48 : index
    %c0_21 = arith.constant 0 : index
    %20 = vector.load %arg7[%c48, %c0_21] : memref<72x384xbf16, #tpu.memory_space<vmem>>, vector<8x384xbf16>
    tpu.vector_store %arg7[%c48, %c0_21], %19 {strides = array<i32>} : memref<72x384xbf16, #tpu.memory_space<vmem>>, vector<8x384xbf16>,
    %c0_22 = arith.constant 0 : index
    %c0_23 = arith.constant 0 : index
    %c37 = arith.constant 37 : index
    %21 = vector.load %arg1[%c0_22, %c0_23, %c37] : memref<1x8x512xbf16, #tpu.memory_space<vmem>>, vector<1x8x384xbf16>
    %22 = vector.shape_cast %21 : vector<1x8x384xbf16> to vector<8x384xbf16>
    %c56 = arith.constant 56 : index
    %c0_24 = arith.constant 0 : index
    %23 = vector.load %arg7[%c56, %c0_24] : memref<72x384xbf16, #tpu.memory_space<vmem>>, vector<8x384xbf16>
    tpu.vector_store %arg7[%c56, %c0_24], %22 {strides = array<i32>} : memref<72x384xbf16, #tpu.memory_space<vmem>>, vector<8x384xbf16>,
    %c0_25 = arith.constant 0 : index
    %c0_26 = arith.constant 0 : index
    %c38 = arith.constant 38 : index
    %24 = vector.load %arg1[%c0_25, %c0_26, %c38] : memref<1x8x512xbf16, #tpu.memory_space<vmem>>, vector<1x8x384xbf16>
    %25 = vector.shape_cast %24 : vector<1x8x384xbf16> to vector<8x384xbf16>
    %c64 = arith.constant 64 : index
    %c0_27 = arith.constant 0 : index
    %26 = vector.load %arg7[%c64, %c0_27] : memref<72x384xbf16, #tpu.memory_space<vmem>>, vector<8x384xbf16>
    tpu.vector_store %arg7[%c64, %c0_27], %25 {strides = array<i32>} : memref<72x384xbf16, #tpu.memory_space<vmem>>, vector<8x384xbf16>,
    %c0_28 = arith.constant 0 : index
    %c0_29 = arith.constant 0 : index
    %27 = vector.load %arg2[%c0_28, %c0_29] : memref<8x72xbf16, #tpu.memory_space<vmem>>, vector<8x72xbf16>
    %c0_30 = arith.constant 0 : index
    %c0_31 = arith.constant 0 : index
    %28 = vector.load %arg7[%c0_30, %c0_31] : memref<72x384xbf16, #tpu.memory_space<vmem>>, vector<72x384xbf16>
    %cst = arith.constant dense<0.000000e+00> : vector<8x384xf32>
    %29 = tpu.matmul %27, %28, %cst {dimension_numbers = #tpu.dot_dimension_numbers<[1], [0], [0], [1], [0, 0, 1, 1], [], []>} : vector<8x72xbf16>, vector<72x384xbf16>, vector<8x384xf32> -> vector<8x384xf32>
    %c0_32 = arith.constant 0 : index
    %c0_33 = arith.constant 0 : index
    %30 = vector.load %arg3[%c0_32, %c0_33] : memref<8x1xf32, #tpu.memory_space<vmem>>, vector<8x1xf32>
    %31 = vector.broadcast %30 : vector<8x1xf32> to vector<8x384xf32>
    %32 = arith.addf %29, %31 : vector<8x384xf32>
    %cst_34 = arith.constant 0.000000e+00 : f32
    %33 = vector.broadcast %cst_34 : f32 to vector<8x384xf32>
    %34 = arith.maximumf %32, %33 : vector<8x384xf32>
    %35 = tpu.iota {dimensions = array<i32: 1>} : vector<8x384xi32>
    %c18_i32 = arith.constant 18 : i32
    %c0_i32 = arith.constant 0 : i32
    %36 = arith.cmpi eq, %c18_i32, %c0_i32 : i32
    %c1_i32 = arith.constant 1 : i32
    %37 = arith.select %36, %c1_i32, %c18_i32 : i32
    %38 = vector.broadcast %37 : i32 to vector<8x384xi32>
    %39 = arith.remsi %35, %38 : vector<8x384xi32>
    %c0_i32_35 = arith.constant 0 : i32
    %40 = vector.broadcast %c0_i32_35 : i32 to vector<8x384xi32>
    %41 = arith.cmpi ne, %39, %40 : vector<8x384xi32>
    %c0_i32_36 = arith.constant 0 : i32
    %42 = vector.broadcast %c0_i32_36 : i32 to vector<8x384xi32>
    %43 = arith.cmpi slt, %39, %42 : vector<8x384xi32>
    %c0_i32_37 = arith.constant 0 : i32
    %44 = arith.cmpi slt, %37, %c0_i32_37 : i32
    %45 = vector.broadcast %44 : i1 to vector<8x384xi1>
    %46 = vector.broadcast %45 : vector<8x384xi1> to vector<8x384xi1>
    %47 = arith.xori %43, %46 : vector<8x384xi1>
    %48 = arith.andi %47, %41 : vector<8x384xi1>
    %49 = vector.broadcast %37 : i32 to vector<8x384xi32>
    %50 = arith.addi %39, %49 : vector<8x384xi32>
    %51 = arith.select %48, %50, %39 : vector<8x384xi1>, vector<8x384xi32>
    %c16_i32 = arith.constant 16 : i32
    %52 = vector.broadcast %c16_i32 : i32 to vector<8x384xi32>
    %53 = arith.cmpi slt, %51, %52 : vector<8x384xi32>
    %c288_i32 = arith.constant 288 : i32
    %54 = vector.broadcast %c288_i32 : i32 to vector<8x384xi32>
    %55 = arith.cmpi slt, %35, %54 : vector<8x384xi32>
    %56 = arith.andi %53, %55 : vector<8x384xi1>
    %cst_38 = arith.constant 0.000000e+00 : f32
    %57 = vector.broadcast %cst_38 : f32 to vector<8x384xf32>
    %58 = arith.select %56, %34, %57 : vector<8x384xi1>, vector<8x384xf32>
    %59 = arith.truncf %58 : vector<8x384xf32> to vector<8x384xbf16>
    %cst_39 = arith.constant 0.000000e+00 : bf16
    %60 = vector.broadcast %cst_39 : bf16 to vector<8x512xbf16>
    %c0_40 = arith.constant 0 : index
    %c0_41 = arith.constant 0 : index
    %61 = vector.load %arg8[%c0_40, %c0_41] : memref<8x512xbf16, #tpu.memory_space<vmem>>, vector<8x512xbf16>
    tpu.vector_store %arg8[%c0_40, %c0_41], %60 {strides = array<i32>} : memref<8x512xbf16, #tpu.memory_space<vmem>>, vector<8x512xbf16>,
    %c0_42 = arith.constant 0 : index
    %c19_43 = arith.constant 19 : index
    %62 = vector.load %arg8[%c0_42, %c19_43] : memref<8x512xbf16, #tpu.memory_space<vmem>>, vector<8x384xbf16>
    tpu.vector_store %arg8[%c0_42, %c19_43], %59 {strides = array<i32>} : memref<8x512xbf16, #tpu.memory_space<vmem>>, vector<8x384xbf16>,
    %c0_44 = arith.constant 0 : index
    %c0_45 = arith.constant 0 : index
    %63 = vector.load %arg8[%c0_44, %c0_45] : memref<8x512xbf16, #tpu.memory_space<vmem>>, vector<8x384xbf16>
    %c0_46 = arith.constant 0 : index
    %c0_47 = arith.constant 0 : index
    %64 = vector.load %arg7[%c0_46, %c0_47] : memref<72x384xbf16, #tpu.memory_space<vmem>>, vector<8x384xbf16>
    tpu.vector_store %arg7[%c0_46, %c0_47], %63 {strides = array<i32>} : memref<72x384xbf16, #tpu.memory_space<vmem>>, vector<8x384xbf16>,
    %c0_48 = arith.constant 0 : index
    %c1_49 = arith.constant 1 : index
    %65 = vector.load %arg8[%c0_48, %c1_49] : memref<8x512xbf16, #tpu.memory_space<vmem>>, vector<8x384xbf16>
    %c8_50 = arith.constant 8 : index
    %c0_51 = arith.constant 0 : index
    %66 = vector.load %arg7[%c8_50, %c0_51] : memref<72x384xbf16, #tpu.memory_space<vmem>>, vector<8x384xbf16>
    tpu.vector_store %arg7[%c8_50, %c0_51], %65 {strides = array<i32>} : memref<72x384xbf16, #tpu.memory_space<vmem>>, vector<8x384xbf16>,
    %c0_52 = arith.constant 0 : index
    %c2_53 = arith.constant 2 : index
    %67 = vector.load %arg8[%c0_52, %c2_53] : memref<8x512xbf16, #tpu.memory_space<vmem>>, vector<8x384xbf16>
    %c16_54 = arith.constant 16 : index
    %c0_55 = arith.constant 0 : index
    %68 = vector.load %arg7[%c16_54, %c0_55] : memref<72x384xbf16, #tpu.memory_space<vmem>>, vector<8x384xbf16>
    tpu.vector_store %arg7[%c16_54, %c0_55], %67 {strides = array<i32>} : memref<72x384xbf16, #tpu.memory_space<vmem>>, vector<8x384xbf16>,
    %c0_56 = arith.constant 0 : index
    %c18_57 = arith.constant 18 : index
    %69 = vector.load %arg8[%c0_56, %c18_57] : memref<8x512xbf16, #tpu.memory_space<vmem>>, vector<8x384xbf16>
    %c24_58 = arith.constant 24 : index
    %c0_59 = arith.constant 0 : index
    %70 = vector.load %arg7[%c24_58, %c0_59] : memref<72x384xbf16, #tpu.memory_space<vmem>>, vector<8x384xbf16>
    tpu.vector_store %arg7[%c24_58, %c0_59], %69 {strides = array<i32>} : memref<72x384xbf16, #tpu.memory_space<vmem>>, vector<8x384xbf16>,
    %c0_60 = arith.constant 0 : index
    %c19_61 = arith.constant 19 : index
    %71 = vector.load %arg8[%c0_60, %c19_61] : memref<8x512xbf16, #tpu.memory_space<vmem>>, vector<8x384xbf16>
    %c32_62 = arith.constant 32 : index
    %c0_63 = arith.constant 0 : index
    %72 = vector.load %arg7[%c32_62, %c0_63] : memref<72x384xbf16, #tpu.memory_space<vmem>>, vector<8x384xbf16>
    tpu.vector_store %arg7[%c32_62, %c0_63], %71 {strides = array<i32>} : memref<72x384xbf16, #tpu.memory_space<vmem>>, vector<8x384xbf16>,
    %c0_64 = arith.constant 0 : index
    %c20_65 = arith.constant 20 : index
    %73 = vector.load %arg8[%c0_64, %c20_65] : memref<8x512xbf16, #tpu.memory_space<vmem>>, vector<8x384xbf16>
    %c40_66 = arith.constant 40 : index
    %c0_67 = arith.constant 0 : index
    %74 = vector.load %arg7[%c40_66, %c0_67] : memref<72x384xbf16, #tpu.memory_space<vmem>>, vector<8x384xbf16>
    tpu.vector_store %arg7[%c40_66, %c0_67], %73 {strides = array<i32>} : memref<72x384xbf16, #tpu.memory_space<vmem>>, vector<8x384xbf16>,
    %c0_68 = arith.constant 0 : index
    %c36_69 = arith.constant 36 : index
    %75 = vector.load %arg8[%c0_68, %c36_69] : memref<8x512xbf16, #tpu.memory_space<vmem>>, vector<8x384xbf16>
    %c48_70 = arith.constant 48 : index
    %c0_71 = arith.constant 0 : index
    %76 = vector.load %arg7[%c48_70, %c0_71] : memref<72x384xbf16, #tpu.memory_space<vmem>>, vector<8x384xbf16>
    tpu.vector_store %arg7[%c48_70, %c0_71], %75 {strides = array<i32>} : memref<72x384xbf16, #tpu.memory_space<vmem>>, vector<8x384xbf16>,
    %c0_72 = arith.constant 0 : index
    %c37_73 = arith.constant 37 : index
    %77 = vector.load %arg8[%c0_72, %c37_73] : memref<8x512xbf16, #tpu.memory_space<vmem>>, vector<8x384xbf16>
    %c56_74 = arith.constant 56 : index
    %c0_75 = arith.constant 0 : index
    %78 = vector.load %arg7[%c56_74, %c0_75] : memref<72x384xbf16, #tpu.memory_space<vmem>>, vector<8x384xbf16>
    tpu.vector_store %arg7[%c56_74, %c0_75], %77 {strides = array<i32>} : memref<72x384xbf16, #tpu.memory_space<vmem>>, vector<8x384xbf16>,
    %c0_76 = arith.constant 0 : index
    %c38_77 = arith.constant 38 : index
    %79 = vector.load %arg8[%c0_76, %c38_77] : memref<8x512xbf16, #tpu.memory_space<vmem>>, vector<8x384xbf16>
    %c64_78 = arith.constant 64 : index
    %c0_79 = arith.constant 0 : index
    %80 = vector.load %arg7[%c64_78, %c0_79] : memref<72x384xbf16, #tpu.memory_space<vmem>>, vector<8x384xbf16>
    tpu.vector_store %arg7[%c64_78, %c0_79], %79 {strides = array<i32>} : memref<72x384xbf16, #tpu.memory_space<vmem>>, vector<8x384xbf16>,
    %c0_80 = arith.constant 0 : index
    %c0_81 = arith.constant 0 : index
    %81 = vector.load %arg4[%c0_80, %c0_81] : memref<8x72xbf16, #tpu.memory_space<vmem>>, vector<8x72xbf16>
    %c0_82 = arith.constant 0 : index
    %c0_83 = arith.constant 0 : index
    %82 = vector.load %arg7[%c0_82, %c0_83] : memref<72x384xbf16, #tpu.memory_space<vmem>>, vector<72x384xbf16>
    %cst_84 = arith.constant dense<0.000000e+00> : vector<8x384xf32>
    %83 = tpu.matmul %81, %82, %cst_84 {dimension_numbers = #tpu.dot_dimension_numbers<[1], [0], [0], [1], [0, 0, 1, 1], [], []>} : vector<8x72xbf16>, vector<72x384xbf16>, vector<8x384xf32> -> vector<8x384xf32>
    %c0_85 = arith.constant 0 : index
    %c0_86 = arith.constant 0 : index
    %84 = vector.load %arg5[%c0_85, %c0_86] : memref<8x1xf32, #tpu.memory_space<vmem>>, vector<8x1xf32>
    %85 = vector.broadcast %84 : vector<8x1xf32> to vector<8x384xf32>
    %86 = arith.addf %83, %85 : vector<8x384xf32>
    %c0_87 = arith.constant 0 : index
    %c0_88 = arith.constant 0 : index
    %c19_89 = arith.constant 19 : index
    %87 = vector.load %arg1[%c0_87, %c0_88, %c19_89] : memref<1x8x512xbf16, #tpu.memory_space<vmem>>, vector<1x8x384xbf16>
    %88 = vector.shape_cast %87 : vector<1x8x384xbf16> to vector<8x384xbf16>
    %89 = arith.extf %88 : vector<8x384xbf16> to vector<8x384xf32>
    %90 = arith.addf %86, %89 : vector<8x384xf32>
    %cst_90 = arith.constant 0.000000e+00 : f32
    %91 = vector.broadcast %cst_90 : f32 to vector<8x384xf32>
    %92 = arith.maximumf %90, %91 : vector<8x384xf32>
    %c0_91 = arith.constant 0 : index
    %c0_92 = arith.constant 0 : index
    %c0_93 = arith.constant 0 : index
    %93 = vector.load %arg6[%c0_91, %c0_92, %c0_93] : memref<1x8x384xf32, #tpu.memory_space<vmem>>, vector<1x8x384xf32>
    %94 = vector.shape_cast %93 : vector<1x8x384xf32> to vector<8x384xf32>
    %95 = vector.shape_cast %92 : vector<8x384xf32> to vector<1x8x384xf32>
    tpu.vector_store %arg6[%c0_91, %c0_92, %c0_93], %95 {strides = array<i32>} : memref<1x8x384xf32, #tpu.memory_space<vmem>>, vector<1x8x384xf32>,
    return
  }
  func.func @transform_0(%arg0: i32) -> (i32, i32, i32) {
    %c0_i32 = arith.constant 0 : i32
    %c0_i32_0 = arith.constant 0 : i32
    %c0_i32_1 = arith.constant 0 : i32
    return %arg0, %c0_i32, %c0_i32_0 : i32, i32, i32
  }
  func.func @transform_1(%arg0: i32) -> (i32, i32) {
    %c0_i32 = arith.constant 0 : i32
    %c0_i32_0 = arith.constant 0 : i32
    %c0_i32_1 = arith.constant 0 : i32
    return %c0_i32, %c0_i32_0 : i32, i32
  }
  func.func @transform_2(%arg0: i32) -> (i32, i32) {
    %c0_i32 = arith.constant 0 : i32
    %c0_i32_0 = arith.constant 0 : i32
    %c0_i32_1 = arith.constant 0 : i32
    return %c0_i32, %c0_i32_0 : i32, i32
  }
  func.func @transform_3(%arg0: i32) -> (i32, i32) {
    %c0_i32 = arith.constant 0 : i32
    %c0_i32_0 = arith.constant 0 : i32
    %c0_i32_1 = arith.constant 0 : i32
    return %c0_i32, %c0_i32_0 : i32, i32
  }
  func.func @transform_4(%arg0: i32) -> (i32, i32) {
    %c0_i32 = arith.constant 0 : i32
    %c0_i32_0 = arith.constant 0 : i32
    %c0_i32_1 = arith.constant 0 : i32
    return %c0_i32, %c0_i32_0 : i32, i32
  }
  func.func @transform_5(%arg0: i32) -> (i32, i32, i32) {
    %c0_i32 = arith.constant 0 : i32
    %c0_i32_0 = arith.constant 0 : i32
    %c0_i32_1 = arith.constant 0 : i32
    return %arg0, %c0_i32, %c0_i32_0 : i32, i32, i32
  }
}

</mosaic_0001>

<llo_original>
// kernel: basic_block_forward.1
$region0: #{basic_block_forward.1}
  #allocation0 [shape = 'u32[]', space=smem, size = 0x4, offset = 0x4, fixed_abs, tag = 'smem constant byte address 0x4 - core index']
  #allocation1 [shape = 'u32[72,128]{1,0:T(1,128)}', space=vmem, size = 0x9000, scoped, tag = 'internal scratch']
  #allocation2 [shape = 'bf16[72,384]{1,0:T(8,128)(2,1)}', space=vmem, size = 0xd800, scoped, tag = 'scratch operand']
  #allocation3 [shape = 'bf16[8,512]{1,0:T(8,128)(2,1)}', space=vmem, size = 0x2000, scoped, tag = 'scratch operand']
  %s0 = inlined_call_operand.vmem [shape: bf16[2,8,512], index: 0, kind: input, shape index: {}]
  %s1 = inlined_call_operand.vmem [shape: bf16[8,72], index: 1, kind: input, shape index: {}]
  %s2 = inlined_call_operand.vmem [shape: f32[8,1], index: 2, kind: input, shape index: {}]
  %s3 = inlined_call_operand.vmem [shape: bf16[8,72], index: 3, kind: input, shape index: {}]
  %s4 = inlined_call_operand.vmem [shape: f32[8,1], index: 4, kind: input, shape index: {}]
  %s5 = inlined_call_operand.vmem [shape: f32[2,8,384], index: 5, kind: output, shape index: {}]
  %s6 = sld [smem:[#allocation0]]
  $region53: #{basic_block_forward.1} parent=0
    _
  %s8 = ssub.s32 1, %s6
  %s9 = scalar_select 0, %s8, %s6
  loop: start=0, step=1, limit=4
  $region2: #{basic_block_forward.1} parent=0 // loop_pre_header
    _
  $region3: #{basic_block_forward.1} parent=0 // loop_header
    %s11 = sphi 0, %s15
    %p12 = scmp.ge.s32.totalorder %s11, 4
    %s21 = sphi 0, %s23
    %s24 = sphi 0, %s21
    %s25 = sphi 0, %s24
    %s41 = sphi 0, %s25
    %s45 = sphi 0, %s45
    %s47 = sphi 0, %s45
    %s48 = sphi 0, %s47
    %s62 = sphi 0, %s48
    %s66 = sphi 0, %s66
    %s68 = sphi 0, %s66
    %s69 = sphi 0, %s68
    %s83 = sphi 0, %s69
    %s87 = sphi 0, %s87
    %s89 = sphi 0, %s87
    %s90 = sphi 0, %s89
    %s104 = sphi 0, %s90
    %s108 = sphi 0, %s108
    %s110 = sphi 0, %s108
    %s111 = sphi 0, %s110
    %s125 = sphi 0, %s111
    %s131 = sphi 0, %s133
    %s134 = sphi 0, %s131
    %s135 = sphi 0, %s134
    %s151 = sphi 0, %s135
  $region4: #{basic_block_forward.1} parent=0 // loop_header_branch
    %14 = sbr.rel (%p12) target = $region8
  $region5: #{basic_block_forward.1} parent=0 // loop_body
    %s16 = ssub.s32 %s11, 1
    %s17 = ssub.s32 %s11, 2
    %s18 = sadd.s32 %s11, 1
    %s19 = ssub.s32 %s11, %s18
    %p20 = scmp.eq.s32.totalorder %s19, 0
    %s22 = sadd.s32 %s21, 1
    %s23 = scalar_select %p20, %s21, %s22
    %p26 = pneg %p20
    %p27 = scmp.eq.s32.totalorder %s11, 1
    %p28 = por %p26, %p27
    %p29 = scmp.ne.s32.totalorder %s21, %s24
    %p30 = scmp.eq.s32.totalorder %s11, 0
    %p31 = por %p29, %p30
    %p32 = scmp.ne.s32.totalorder %s21, %s24
    %p33 = scmp.eq.s32.totalorder %s16, 1
    %p34 = por %p32, %p33
    %p35 = scmp.ne.s32.totalorder %s24, %s25
    %p36 = scmp.eq.s32.totalorder %s16, 0
    %p37 = por %p35, %p36
    %p38 = scmp.ne.s32.totalorder %s24, %s25
    %p39 = scmp.eq.s32.totalorder %s17, 1
    %p40 = por %p38, %p39
    %p42 = scmp.ne.s32.totalorder %s25, %s41
    %p43 = scmp.eq.s32.totalorder %s17, 0
    %p44 = por %p42, %p43
    %s46 = sadd.s32 %s45, 1
    %p49 = scmp.eq.s32.totalorder %s11, 1
    %p50 = scmp.ne.s32.totalorder %s45, %s47
    %p51 = scmp.eq.s32.totalorder %s11, 0
    %p52 = por %p50, %p51
    %p53 = scmp.ne.s32.totalorder %s45, %s47
    %p54 = scmp.eq.s32.totalorder %s16, 1
    %p55 = por %p53, %p54
    %p56 = scmp.ne.s32.totalorder %s47, %s48
    %p57 = scmp.eq.s32.totalorder %s16, 0
    %p58 = por %p56, %p57
    %p59 = scmp.ne.s32.totalorder %s47, %s48
    %p60 = scmp.eq.s32.totalorder %s17, 1
    %p61 = por %p59, %p60
    %p63 = scmp.ne.s32.totalorder %s48, %s62
    %p64 = scmp.eq.s32.totalorder %s17, 0
    %p65 = por %p63, %p64
    %s67 = sadd.s32 %s66, 1
    %p70 = scmp.eq.s32.totalorder %s11, 1
    %p71 = scmp.ne.s32.totalorder %s66, %s68
    %p72 = scmp.eq.s32.totalorder %s11, 0
    %p73 = por %p71, %p72
    %p74 = scmp.ne.s32.totalorder %s66, %s68
    %p75 = scmp.eq.s32.totalorder %s16, 1
    %p76 = por %p74, %p75
    %p77 = scmp.ne.s32.totalorder %s68, %s69
    %p78 = scmp.eq.s32.totalorder %s16, 0
    %p79 = por %p77, %p78
    %p80 = scmp.ne.s32.totalorder %s68, %s69
    %p81 = scmp.eq.s32.totalorder %s17, 1
    %p82 = por %p80, %p81
    %p84 = scmp.ne.s32.totalorder %s69, %s83
    %p85 = scmp.eq.s32.totalorder %s17, 0
    %p86 = por %p84, %p85
    %s88 = sadd.s32 %s87, 1
    %p91 = scmp.eq.s32.totalorder %s11, 1
    %p92 = scmp.ne.s32.totalorder %s87, %s89
    %p93 = scmp.eq.s32.totalorder %s11, 0
    %p94 = por %p92, %p93
    %p95 = scmp.ne.s32.totalorder %s87, %s89
    %p96 = scmp.eq.s32.totalorder %s16, 1
    %p97 = por %p95, %p96
    %p98 = scmp.ne.s32.totalorder %s89, %s90
    %p99 = scmp.eq.s32.totalorder %s16, 0
    %p100 = por %p98, %p99
    %p101 = scmp.ne.s32.totalorder %s89, %s90
    %p102 = scmp.eq.s32.totalorder %s17, 1
    %p103 = por %p101, %p102
    %p105 = scmp.ne.s32.totalorder %s90, %s104
    %p106 = scmp.eq.s32.totalorder %s17, 0
    %p107 = por %p105, %p106
    %s109 = sadd.s32 %s108, 1
    %p112 = scmp.eq.s32.totalorder %s11, 1
    %p113 = scmp.ne.s32.totalorder %s108, %s110
    %p114 = scmp.eq.s32.totalorder %s11, 0
    %p115 = por %p113, %p114
    %p116 = scmp.ne.s32.totalorder %s108, %s110
    %p117 = scmp.eq.s32.totalorder %s16, 1
    %p118 = por %p116, %p117
    %p119 = scmp.ne.s32.totalorder %s110, %s111
    %p120 = scmp.eq.s32.totalorder %s16, 0
    %p121 = por %p119, %p120
    %p122 = scmp.ne.s32.totalorder %s110, %s111
    %p123 = scmp.eq.s32.totalorder %s17, 1
    %p124 = por %p122, %p123
    %p126 = scmp.ne.s32.totalorder %s111, %s125
    %p127 = scmp.eq.s32.totalorder %s17, 0
    %p128 = por %p126, %p127
    %s129 = ssub.s32 %s11, %s18
    %p130 = scmp.eq.s32.totalorder %s129, 0
    %s132 = sadd.s32 %s131, 1
    %s133 = scalar_select %p130, %s131, %s132
    %p136 = pneg %p130
    %p137 = scmp.eq.s32.totalorder %s11, 1
    %p138 = por %p136, %p137
    %p139 = scmp.ne.s32.totalorder %s131, %s134
    %p140 = scmp.eq.s32.totalorder %s11, 0
    %p141 = por %p139, %p140
    %p142 = scmp.ne.s32.totalorder %s131, %s134
    %p143 = scmp.eq.s32.totalorder %s16, 1
    %p144 = por %p142, %p143
    %p145 = scmp.ne.s32.totalorder %s134, %s135
    %p146 = scmp.eq.s32.totalorder %s16, 0
    %p147 = por %p145, %p146
    %p148 = scmp.ne.s32.totalorder %s134, %s135
    %p149 = scmp.eq.s32.totalorder %s17, 1
    %p150 = por %p148, %p149
    %p152 = scmp.ne.s32.totalorder %s135, %s151
    %p153 = scmp.eq.s32.totalorder %s17, 0
    %p154 = por %p152, %p153
    %p155 = scmp.le.s32.totalorder 1, %s11
    %p156 = scmp.lt.s32.totalorder %s11, 3
    %p157 = pnand %p155, %p156
    %p158 = pneg %p157
    // Predicated region
    $region9: #{basic_block_forward.1} parent=5 // pred_check
      _
    $region10: #{basic_block_forward.1} parent=5 // pred_check_branch
      %160 = sbr.rel (%p157) target = $region12
    $region11: #{basic_block_forward.1} parent=5 // pred_region
      %s161 = ssub.s32 %s11, 1
      // Predicated region
      $region13: #{basic_block_forward.1} parent=11 // pred_check
        %p162 = pneg %p58
      $region14: #{basic_block_forward.1} parent=11 // pred_check_branch
        %164 = sbr.rel (%p162) target = $region16
      $region15: #{basic_block_forward.1} parent=11 // pred_region
        _
      $region16: #{basic_block_forward.1} parent=11 // pred_fallthru
        _
      // Predicated region
      $region17: #{basic_block_forward.1} parent=11 // pred_check
        %p165 = pneg %p79
      $region18: #{basic_block_forward.1} parent=11 // pred_check_branch
        %167 = sbr.rel (%p165) target = $region20
      $region19: #{basic_block_forward.1} parent=11 // pred_region
        _
      $region20: #{basic_block_forward.1} parent=11 // pred_fallthru
        _
      // Predicated region
      $region21: #{basic_block_forward.1} parent=11 // pred_check
        %p168 = pneg %p100
      $region22: #{basic_block_forward.1} parent=11 // pred_check_branch
        %170 = sbr.rel (%p168) target = $region24
      $region23: #{basic_block_forward.1} parent=11 // pred_region
        _
      $region24: #{basic_block_forward.1} parent=11 // pred_fallthru
        _
      // Predicated region
      $region25: #{basic_block_forward.1} parent=11 // pred_check
        %p171 = pneg %p121
      $region26: #{basic_block_forward.1} parent=11 // pred_check_branch
        %173 = sbr.rel (%p171) target = $region28
      $region27: #{basic_block_forward.1} parent=11 // pred_region
        _
      $region28: #{basic_block_forward.1} parent=11 // pred_fallthru
        _
    $region12: #{basic_block_forward.1} parent=5 // pred_fallthru
      _
    %p174 = scmp.lt.s32.totalorder %s11, 2
    // Predicated region
    $region29: #{basic_block_forward.1} parent=5 // pred_check
      %p175 = pneg %p174
    $region30: #{basic_block_forward.1} parent=5 // pred_check_branch
      %177 = sbr.rel (%p175) target = $region32
    $region31: #{basic_block_forward.1} parent=5 // pred_region
      // Predicated region
      $region33: #{basic_block_forward.1} parent=31 // pred_check
        %p178 = pneg %p31
      $region34: #{basic_block_forward.1} parent=31 // pred_check_branch
        %180 = sbr.rel (%p178) target = $region36
      $region35: #{basic_block_forward.1} parent=31 // pred_region
        %p181 = scmp.lt.s32.totalorder %s11, 1
        %s182 = scalar_select %p181, %s11, 1
        %s183 = smul.addr %s182, 4
        %s184 = smul.addr %s183, 4
        %s185 = scalar_lea.vmem %s0, %s184
      $region36: #{basic_block_forward.1} parent=31 // pred_fallthru
        _
    $region32: #{basic_block_forward.1} parent=5 // pred_fallthru
      _
    %p186 = scmp.le.s32.totalorder 1, %s11
    %p187 = scmp.lt.s32.totalorder %s11, 3
    %p188 = pnand %p186, %p187
    %p189 = pneg %p188
    // Predicated region
    $region37: #{basic_block_forward.1} parent=5 // pred_check
      _
    $region38: #{basic_block_forward.1} parent=5 // pred_check_branch
      %191 = sbr.rel (%p188) target = $region40
    $region39: #{basic_block_forward.1} parent=5 // pred_region
      %s192 = ssub.s32 %s11, 1
      %p193 = scmp.lt.s32.totalorder %s16, 1
      %s194 = scalar_select %p193, %s16, 1
      %s195 = smul.addr %s194, 4
      %s196 = smul.addr %s195, 4
      %s197 = scalar_lea.vmem %s0, %s196
      %p198 = pneg %p37
      %p199 = pneg %p34
      %p200 = pneg %p58
      %p201 = pneg %p55
      %p202 = pneg %p79
      %p203 = pneg %p76
      %p204 = pneg %p100
      %p205 = pneg %p97
      %p206 = pneg %p121
      %p207 = pneg %p118
      %p208 = pneg %p147
      %p209 = pneg %p144
      %p210 = scmp.lt.s32.totalorder %s16, 1
      %s211 = scalar_select %p210, %s16, 1
      %s212 = smul.addr %s211, 3
      %s213 = smul.addr %s212, 8
      %s214 = scalar_lea.vmem %s5, %s213
      %p215 = scmp.lt.s32.totalorder %s16, 1
      %s216 = scalar_select %p215, %s16, 1
      %s217 = smul.addr %s216, 4
      %s218 = smul.addr %s217, 4
      %s219 = scalar_lea.vmem %s0, %s218
      %p220 = scmp.lt.s32.totalorder %s16, 1
      %s221 = scalar_select %p220, %s16, 1
      %s222 = smul.addr %s221, 3
      %s223 = smul.addr %s222, 8
      %s224 = scalar_lea.vmem %s5, %s223
      %v226 = vld [vmem:[%s219] sm:$0xff]
      %v227 = vld [vmem:[%s219 + $0x8] sm:$0xf]
      %228 = vst [vmem:[#allocation2] sm:$0xff] %v226
      %229 = vst [vmem:[#allocation2 + $0x8] sm:$0xf] %v227
      %v230 = vld [vmem:[%s219] sm:$0xff]
      %v231 = vld [vmem:[%s219 + $0x8] sm:$0xff]
      %234 = vrot.lane.b32.xlu0 %v230, 127
      %v235 = vpop.permute.xlu0 %234
      %236 = vrot.lane.b32.xlu0 %v231, 127
      %v237 = vpop.permute.xlu0 %236
      %v238 = vrot.slane %v235, 4
      %v239 = vrot.slane %v237, 4
      %vm240 = vcmask 1043456
      %v241 = vsel %vm240, %v238, %v239
      %vm242 = vcmask 1039360
      %v243 = vsel %vm242, %v235, %v241
      %v244 = vsel %vm242, %v237, %v239
      %247 = vst [vmem:[#allocation2 + $0xc] sm:$0xff] %v243
      %248 = vst [vmem:[#allocation2 + $0x14] sm:$0xf] %v244
      %v249 = vld [vmem:[%s219] sm:$0xff]
      %v250 = vld [vmem:[%s219 + $0x8] sm:$0xff]
      %253 = vrot.lane.b32.xlu0 %v249, 126
      %v254 = vpop.permute.xlu0 %253
      %255 = vrot.lane.b32.xlu0 %v250, 126
      %v256 = vpop.permute.xlu0 %255
      %v257 = vrot.slane %v254, 4
      %v258 = vrot.slane %v256, 4
      %v259 = vsel %vm240, %v257, %v258
      %vm260 = vcmask 1031168
      %v261 = vsel %vm260, %v254, %v259
      %v262 = vsel %vm260, %v256, %v258
      %265 = vst [vmem:[#allocation2 + $0x18] sm:$0xff] %v261
      %266 = vst [vmem:[#allocation2 + $0x20] sm:$0xf] %v262
      %v267 = vld [vmem:[%s219] sm:$0xff]
      %v268 = vld [vmem:[%s219 + $0x8] sm:$0xff]
      %271 = vrot.lane.b32.xlu0 %v267, 110
      %v272 = vpop.permute.xlu0 %271
      %273 = vrot.lane.b32.xlu0 %v268, 110
      %v274 = vpop.permute.xlu0 %273
      %v275 = vrot.slane %v272, 4
      %v276 = vrot.slane %v274, 4
      %v277 = vsel %vm240, %v275, %v276
      %vm278 = vcmask 900096
      %v279 = vsel %vm278, %v272, %v277
      %v280 = vsel %vm278, %v274, %v276
      %283 = vst [vmem:[#allocation2 + $0x24] sm:$0xff] %v279
      %284 = vst [vmem:[#allocation2 + $0x2c] sm:$0xf] %v280
      %v285 = vld [vmem:[%s219] sm:$0xff]
      %v286 = vld [vmem:[%s219 + $0x8] sm:$0xff]
      %289 = vrot.lane.b32.xlu0 %v285, 109
      %v290 = vpop.permute.xlu0 %289
      %291 = vrot.lane.b32.xlu0 %v286, 109
      %v292 = vpop.permute.xlu0 %291
      %v293 = vrot.slane %v290, 4
      %v294 = vrot.slane %v292, 4
      %v295 = vsel %vm240, %v293, %v294
      %vm296 = vcmask 891904
      %v297 = vsel %vm296, %v290, %v295
      %v298 = vsel %vm296, %v292, %v294
      %301 = vst [vmem:[#allocation2 + $0x30] sm:$0xff] %v297
      %302 = vst [vmem:[#allocation2 + $0x38] sm:$0xf] %v298
      %v303 = vld [vmem:[%s219] sm:$0xff]
      %v304 = vld [vmem:[%s219 + $0x8] sm:$0xff]
      %307 = vrot.lane.b32.xlu0 %v303, 108
      %v308 = vpop.permute.xlu0 %307
      %309 = vrot.lane.b32.xlu0 %v304, 108
      %v310 = vpop.permute.xlu0 %309
      %v311 = vrot.slane %v308, 4
      %v312 = vrot.slane %v310, 4
      %v313 = vsel %vm240, %v311, %v312
      %vm314 = vcmask 883712
      %v315 = vsel %vm314, %v308, %v313
      %v316 = vsel %vm314, %v310, %v312
      %319 = vst [vmem:[#allocation2 + $0x3c] sm:$0xff] %v315
      %320 = vst [vmem:[#allocation2 + $0x44] sm:$0xf] %v316
      %v321 = vld [vmem:[%s219] sm:$0xff]
      %v322 = vld [vmem:[%s219 + $0x8] sm:$0xff]
      %325 = vrot.lane.b32.xlu0 %v321, 92
      %v326 = vpop.permute.xlu0 %325
      %327 = vrot.lane.b32.xlu0 %v322, 92
      %v328 = vpop.permute.xlu0 %327
      %v329 = vrot.slane %v326, 4
      %v330 = vrot.slane %v328, 4
      %v331 = vsel %vm240, %v329, %v330
      %vm332 = vcmask 752640
      %v333 = vsel %vm332, %v326, %v331
      %v334 = vsel %vm332, %v328, %v330
      %337 = vst [vmem:[#allocation2 + $0x48] sm:$0xff] %v333
      %338 = vst [vmem:[#allocation2 + $0x50] sm:$0xf] %v334
      %v339 = vld [vmem:[%s219] sm:$0xff]
      %v340 = vld [vmem:[%s219 + $0x8] sm:$0xff]
      %343 = vrot.lane.b32.xlu0 %v339, 91
      %v344 = vpop.permute.xlu0 %343
      %345 = vrot.lane.b32.xlu0 %v340, 91
      %v346 = vpop.permute.xlu0 %345
      %v347 = vrot.slane %v344, 4
      %v348 = vrot.slane %v346, 4
      %v349 = vsel %vm240, %v347, %v348
      %vm350 = vcmask 744448
      %v351 = vsel %vm350, %v344, %v349
      %v352 = vsel %vm350, %v346, %v348
      %355 = vst [vmem:[#allocation2 + $0x54] sm:$0xff] %v351
      %356 = vst [vmem:[#allocation2 + $0x5c] sm:$0xf] %v352
      %v357 = vld [vmem:[%s219] sm:$0xff]
      %v358 = vld [vmem:[%s219 + $0x8] sm:$0xff]
      %361 = vrot.lane.b32.xlu0 %v357, 90
      %v362 = vpop.permute.xlu0 %361
      %363 = vrot.lane.b32.xlu0 %v358, 90
      %v364 = vpop.permute.xlu0 %363
      %v365 = vrot.slane %v362, 4
      %v366 = vrot.slane %v364, 4
      %v367 = vsel %vm240, %v365, %v366
      %vm368 = vcmask 736256
      %v369 = vsel %vm368, %v362, %v367
      %v370 = vsel %vm368, %v364, %v366
      %373 = vst [vmem:[#allocation2 + $0x60] sm:$0xff] %v369
      %374 = vst [vmem:[#allocation2 + $0x68] sm:$0xf] %v370
      %v375 = vld [vmem:[%s1] sm:$0xf]
      %v376 = vld [vmem:[#allocation2] sm:$0xff]
      %v377 = vld [vmem:[#allocation2 + $0x8] sm:$0xf]
      %v378 = vld [vmem:[#allocation2 + $0xc] sm:$0xff]
      %v379 = vld [vmem:[#allocation2 + $0x14] sm:$0xf]
      %v380 = vld [vmem:[#allocation2 + $0x18] sm:$0xff]
      %v381 = vld [vmem:[#allocation2 + $0x20] sm:$0xf]
      %v382 = vld [vmem:[#allocation2 + $0x24] sm:$0xff]
      %v383 = vld [vmem:[#allocation2 + $0x2c] sm:$0xf]
      %v384 = vld [vmem:[#allocation2 + $0x30] sm:$0xff]
      %v385 = vld [vmem:[#allocation2 + $0x38] sm:$0xf]
      %v386 = vld [vmem:[#allocation2 + $0x3c] sm:$0xff]
      %v387 = vld [vmem:[#allocation2 + $0x44] sm:$0xf]
      %v388 = vld [vmem:[#allocation2 + $0x48] sm:$0xff]
      %v389 = vld [vmem:[#allocation2 + $0x50] sm:$0xf]
      %v390 = vld [vmem:[#allocation2 + $0x54] sm:$0xff]
      %v391 = vld [vmem:[#allocation2 + $0x5c] sm:$0xf]
      %v392 = vld [vmem:[#allocation2 + $0x60] sm:$0xff]
      %v393 = vld [vmem:[#allocation2 + $0x68] sm:$0xf]
      %v394 = vld [vmem:[%s2] sm:$0xff]
      %396 = vset.pattern.permute.xlu0 0
      %397 = vperm.xlu0 %396, %v394
      %v398 = vpop.permute.xlu0 %397
      %v418 = vunpack.c.l.b16 %v376
      %v419 = vunpack.c.h.b16 %v376
      %v420 = vunpack.c.l.b16 %v377
      %v421 = vunpack.c.l.b16 %v378
      %v422 = vunpack.c.h.b16 %v378
      %v423 = vunpack.c.l.b16 %v379
      %v424 = vunpack.c.l.b16 %v380
      %v425 = vunpack.c.h.b16 %v380
      %v426 = vunpack.c.l.b16 %v381
      %v427 = vunpack.c.l.b16 %v382
      %v428 = vunpack.c.h.b16 %v382
      %v429 = vunpack.c.l.b16 %v383
      %v430 = vunpack.c.l.b16 %v384
      %v431 = vunpack.c.h.b16 %v384
      %v432 = vunpack.c.l.b16 %v385
      %v433 = vunpack.c.l.b16 %v386
      %v434 = vunpack.c.h.b16 %v386
      %v435 = vunpack.c.l.b16 %v387
      %v436 = vunpack.c.l.b16 %v388
      %v437 = vunpack.c.h.b16 %v388
      %v438 = vunpack.c.l.b16 %v389
      %v439 = vunpack.c.l.b16 %v390
      %v440 = vunpack.c.h.b16 %v390
      %v441 = vunpack.c.l.b16 %v391
      %v442 = vunpack.c.l.b16 %v392
      %v443 = vunpack.c.h.b16 %v392
      %v444 = vunpack.c.l.b16 %v393
      %v445 = vpack.c.b16 %v421, %v418
      %v446 = vpack.c.b16 %v422, %v419
      %v447 = vpack.c.b16 %v423, %v420
      %v448 = vpack.c.b16 %v427, %v424
      %v449 = vpack.c.b16 %v428, %v425
      %v450 = vpack.c.b16 %v429, %v426
      %v451 = vpack.c.b16 %v433, %v430
      %v452 = vpack.c.b16 %v434, %v431
      %v453 = vpack.c.b16 %v435, %v432
      %v454 = vpack.c.b16 %v439, %v436
      %v455 = vpack.c.b16 %v440, %v437
      %v456 = vpack.c.b16 %v441, %v438
      %v457 = vpack.c.b16 %v442, %v442
      %v458 = vpack.c.b16 %v443, %v443
      %v459 = vpack.c.b16 %v444, %v444
      %vm472 = vcmask 588800
      %v474 = vsel %vm472, %v375, 0
      %vm476 = vcmask 1043456
      %v478 = vsel %vm476, %v457, 0
      %v481 = vsel %vm476, %v458, 0
      %v484 = vsel %vm476, %v459, 0
      %486 = vmatpush.bf16.msra.mxu0 0
      %487 = vmatpush.bf16.msra.mxu0 0
      %488 = vmatpush.bf16.msra.mxu0 0
      %489 = vmatpush.bf16.msra.mxu0 %v478
      %490 = vmatpush.bf16.msra.mxu0 %v454
      %491 = vmatpush.bf16.msra.mxu0 %v451
      %492 = vmatpush.bf16.msra.mxu0 %v448
      %493 = vmatpush.bf16.msra.mxu0 %v445
      %494 = vmatmul.bf16.gmra.mxu0 %v474
      %v495 = vpop.f32.mrf.mxu0
      %v496 = vadd.f32 %v398, %v495
      %v497 = vpop.f32.mrf.mxu0
      %498 = vdwg.mxu0
      %499 = vmatpush.bf16.msra.mxu0 0
      %500 = vmatpush.bf16.msra.mxu0 0
      %501 = vmatpush.bf16.msra.mxu0 0
      %502 = vmatpush.bf16.msra.mxu0 %v481
      %503 = vmatpush.bf16.msra.mxu0 %v455
      %504 = vmatpush.bf16.msra.mxu0 %v452
      %505 = vmatpush.bf16.msra.mxu0 %v449
      %506 = vmatpush.bf16.msra.mxu0 %v446
      %507 = vmatmul.bf16.gmra.mxu0 %v474
      %v508 = vpop.f32.mrf.mxu0
      %v509 = vadd.f32 %v398, %v508
      %v510 = vpop.f32.mrf.mxu0
      %511 = vdwg.mxu0
      %512 = vmatpush.bf16.msra.mxu0 0
      %513 = vmatpush.bf16.msra.mxu0 0
      %514 = vmatpush.bf16.msra.mxu0 0
      %515 = vmatpush.bf16.msra.mxu0 %v484
      %516 = vmatpush.bf16.msra.mxu0 %v456
      %517 = vmatpush.bf16.msra.mxu0 %v453
      %518 = vmatpush.bf16.msra.mxu0 %v450
      %519 = vmatpush.bf16.msra.mxu0 %v447
      %520 = vmatmul.bf16.gmra.mxu0 %v474
      %v521 = vpop.f32.mrf.mxu0
      %v522 = vadd.f32 %v398, %v521
      %v523 = vpop.f32.mrf.mxu0
      %524 = vdwg.mxu0
      %v525 = vmax.f32 %v496, 0.0
      %v526 = vmax.f32 %v509, 0.0
      %v527 = vmax.f32 %v522, 0.0
      %v528 = vlaneseq
      %v529 = vand.u32 %v528, 127
      %v530 = vadd.s32 %v529, 128
      %v531 = vadd.s32 %v529, 256
      %vm532 = vcmp.lt.s32.totalorder %v529, 0
      %v533 = vsub.s32 0, %v529
      %v534 = vsel %vm532, %v533, %v529
      %v535 = vand.u32 %v534, 65535
      %v536 = vshrl.u32 %v534, 16
      %v538 = vmul.u32 %v535, 14564
      %v539 = vmul.u32 %v535, 58254
      %v540 = vmul.u32 %v536, 14564
      %v541 = vmul.u32 %v536, 58254
      %v542 = vshll.u32 %v539, 16
      %v543 = vshrl.u32 %v539, 16
      %v544 = vshll.u32 %v540, 16
      %v545 = vshrl.u32 %v540, 16
      %vm546 = vc.u32 %v538, %v542
      %v547 = vsel %vm546, 1, 0
      %v548 = vadd.s32 %v538, %v542
      %v549 = vadd.s32 %v541, %v547
      %vm550 = vc.u32 %v548, %v544
      %v551 = vsel %vm550, 1, 0
      %v552 = vadd.s32 %v548, %v544
      %v553 = vadd.s32 %v549, %v551
      %v554 = vadd.s32 %v553, %v543
      %v555 = vadd.s32 %v554, %v545
      %v556 = vshrl.u32 %v555, 4
      %v557 = vmul.u32 %v556, 18
      %v558 = vsub.s32 %v534, %v557
      %v559 = vsub.s32 0, %v558
      %v560 = vsel %vm532, %v559, %v558
      %vm561 = vcmp.lt.s32.totalorder %v530, 0
      %v562 = vsub.s32 0, %v530
      %v563 = vsel %vm561, %v562, %v530
      %v564 = vand.u32 %v563, 65535
      %v565 = vshrl.u32 %v563, 16
      %v567 = vmul.u32 %v564, 14564
      %v568 = vmul.u32 %v564, 58254
      %v569 = vmul.u32 %v565, 14564
      %v570 = vmul.u32 %v565, 58254
      %v571 = vshll.u32 %v568, 16
      %v572 = vshrl.u32 %v568, 16
      %v573 = vshll.u32 %v569, 16
      %v574 = vshrl.u32 %v569, 16
      %vm575 = vc.u32 %v567, %v571
      %v576 = vsel %vm575, 1, 0
      %v577 = vadd.s32 %v567, %v571
      %v578 = vadd.s32 %v570, %v576
      %vm579 = vc.u32 %v577, %v573
      %v580 = vsel %vm579, 1, 0
      %v581 = vadd.s32 %v577, %v573
      %v582 = vadd.s32 %v578, %v580
      %v583 = vadd.s32 %v582, %v572
      %v584 = vadd.s32 %v583, %v574
      %v585 = vshrl.u32 %v584, 4
      %v586 = vmul.u32 %v585, 18
      %v587 = vsub.s32 %v563, %v586
      %v588 = vsub.s32 0, %v587
      %v589 = vsel %vm561, %v588, %v587
      %vm590 = vcmp.lt.s32.totalorder %v531, 0
      %v591 = vsub.s32 0, %v531
      %v592 = vsel %vm590, %v591, %v531
      %v593 = vand.u32 %v592, 65535
      %v594 = vshrl.u32 %v592, 16
      %v596 = vmul.u32 %v593, 14564
      %v597 = vmul.u32 %v593, 58254
      %v598 = vmul.u32 %v594, 14564
      %v599 = vmul.u32 %v594, 58254
      %v600 = vshll.u32 %v597, 16
      %v601 = vshrl.u32 %v597, 16
      %v602 = vshll.u32 %v598, 16
      %v603 = vshrl.u32 %v598, 16
      %vm604 = vc.u32 %v596, %v600
      %v605 = vsel %vm604, 1, 0
      %v606 = vadd.s32 %v596, %v600
      %v607 = vadd.s32 %v599, %v605
      %vm608 = vc.u32 %v606, %v602
      %v609 = vsel %vm608, 1, 0
      %v610 = vadd.s32 %v606, %v602
      %v611 = vadd.s32 %v607, %v609
      %v612 = vadd.s32 %v611, %v601
      %v613 = vadd.s32 %v612, %v603
      %v614 = vshrl.u32 %v613, 4
      %v615 = vmul.u32 %v614, 18
      %v616 = vsub.s32 %v592, %v615
      %v617 = vsub.s32 0, %v616
      %v618 = vsel %vm590, %v617, %v616
      %vm619 = vcmp.ne.s32.totalorder %v560, 0
      %vm620 = vcmp.ne.s32.totalorder %v589, 0
      %vm621 = vcmp.ne.s32.totalorder %v618, 0
      %vm622 = vcmp.lt.s32.totalorder %v560, 0
      %vm623 = vcmp.lt.s32.totalorder %v589, 0
      %vm624 = vcmp.lt.s32.totalorder %v618, 0
      %vm625 = vmand %vm622, %vm619
      %vm626 = vmand %vm623, %vm620
      %vm627 = vmand %vm624, %vm621
      %v628 = vadd.s32 %v560, 18
      %v629 = vadd.s32 %v589, 18
      %v630 = vadd.s32 %v618, 18
      %v631 = vsel %vm625, %v628, %v560
      %v632 = vsel %vm626, %v629, %v589
      %v633 = vsel %vm627, %v630, %v618
      %vm634 = vcmp.lt.s32.totalorder %v631, 16
      %vm635 = vcmp.lt.s32.totalorder %v632, 16
      %vm636 = vcmp.lt.s32.totalorder %v633, 16
      %vm637 = vcmp.lt.s32.totalorder %v529, 288
      %vm638 = vcmp.lt.s32.totalorder %v530, 288
      %vm639 = vcmp.lt.s32.totalorder %v531, 288
      %vm640 = vmand %vm634, %vm637
      %vm641 = vmand %vm635, %vm638
      %vm642 = vmand %vm636, %vm639
      %v643 = vsel %vm640, %v525, 0.0
      %v644 = vsel %vm641, %v526, 0.0
      %v645 = vsel %vm642, %v527, 0.0
      %v646 = vpack.c.bf16 %v644, %v643
      %v647 = vpack.c.bf16 %v645, %v645
      %648 = vst [vmem:[#allocation3] sm:$0xff] 0
      %649 = vst [vmem:[#allocation3 + $0x8] sm:$0xff] 0
      %652 = vrot.lane.b32.xlu0 %v646, 19
      %v653 = vpop.permute.xlu0 %652
      %654 = vrot.lane.b32.xlu0 %v647, 19
      %v655 = vpop.permute.xlu0 %654
      %v656 = vrot.slane %v653, 4
      %v657 = vrot.slane %v655, 4
      %vm658 = vcmask 154624
      %v659 = vsel %vm658, %v656, %v653
      %v660 = vsel %vm240, %v656, %v657
      %v661 = vsel %vm658, %v660, %v655
      %vm664 = vcmask 1043608
      %vm665 = vcmask 1047556
      %vm666 = vmor %vm665, %vm664
      %667 = vst.msk [vmem:[#allocation3] sm:$0xff] %vm666, %v659
      %vm668 = vcmask 154628
      %vm669 = vmor %vm668, %vm476
      %670 = vst.msk [vmem:[#allocation3 + $0x8] sm:$0xff] %vm669, %v661
      %v671 = vld [vmem:[#allocation3] sm:$0xff]
      %v672 = vld [vmem:[#allocation3 + $0x8] sm:$0xf]
      %673 = vst [vmem:[#allocation2] sm:$0xff] %v671
      %674 = vst [vmem:[#allocation2 + $0x8] sm:$0xf] %v672
      %v675 = vld [vmem:[#allocation3] sm:$0xff]
      %v676 = vld [vmem:[#allocation3 + $0x8] sm:$0xff]
      %679 = vrot.lane.b32.xlu0 %v675, 127
      %v680 = vpop.permute.xlu0 %679
      %681 = vrot.lane.b32.xlu0 %v676, 127
      %v682 = vpop.permute.xlu0 %681
      %v683 = vrot.slane %v680, 4
      %v684 = vrot.slane %v682, 4
      %v685 = vsel %vm240, %v683, %v684
      %v686 = vsel %vm242, %v680, %v685
      %v687 = vsel %vm242, %v682, %v684
      %690 = vst [vmem:[#allocation2 + $0xc] sm:$0xff] %v686
      %691 = vst [vmem:[#allocation2 + $0x14] sm:$0xf] %v687
      %v692 = vld [vmem:[#allocation3] sm:$0xff]
      %v693 = vld [vmem:[#allocation3 + $0x8] sm:$0xff]
      %696 = vrot.lane.b32.xlu0 %v692, 126
      %v697 = vpop.permute.xlu0 %696
      %698 = vrot.lane.b32.xlu0 %v693, 126
      %v699 = vpop.permute.xlu0 %698
      %v700 = vrot.slane %v697, 4
      %v701 = vrot.slane %v699, 4
      %v702 = vsel %vm240, %v700, %v701
      %v703 = vsel %vm260, %v697, %v702
      %v704 = vsel %vm260, %v699, %v701
      %707 = vst [vmem:[#allocation2 + $0x18] sm:$0xff] %v703
      %708 = vst [vmem:[#allocation2 + $0x20] sm:$0xf] %v704
      %v709 = vld [vmem:[#allocation3] sm:$0xff]
      %v710 = vld [vmem:[#allocation3 + $0x8] sm:$0xff]
      %713 = vrot.lane.b32.xlu0 %v709, 110
      %v714 = vpop.permute.xlu0 %713
      %715 = vrot.lane.b32.xlu0 %v710, 110
      %v716 = vpop.permute.xlu0 %715
      %v717 = vrot.slane %v714, 4
      %v718 = vrot.slane %v716, 4
      %v719 = vsel %vm240, %v717, %v718
      %v720 = vsel %vm278, %v714, %v719
      %v721 = vsel %vm278, %v716, %v718
      %724 = vst [vmem:[#allocation2 + $0x24] sm:$0xff] %v720
      %725 = vst [vmem:[#allocation2 + $0x2c] sm:$0xf] %v721
      %v726 = vld [vmem:[#allocation3] sm:$0xff]
      %v727 = vld [vmem:[#allocation3 + $0x8] sm:$0xff]
      %730 = vrot.lane.b32.xlu0 %v726, 109
      %v731 = vpop.permute.xlu0 %730
      %732 = vrot.lane.b32.xlu0 %v727, 109
      %v733 = vpop.permute.xlu0 %732
      %v734 = vrot.slane %v731, 4
      %v735 = vrot.slane %v733, 4
      %v736 = vsel %vm240, %v734, %v735
      %v737 = vsel %vm296, %v731, %v736
      %v738 = vsel %vm296, %v733, %v735
      %741 = vst [vmem:[#allocation2 + $0x30] sm:$0xff] %v737
      %742 = vst [vmem:[#allocation2 + $0x38] sm:$0xf] %v738
      %v743 = vld [vmem:[#allocation3] sm:$0xff]
      %v744 = vld [vmem:[#allocation3 + $0x8] sm:$0xff]
      %747 = vrot.lane.b32.xlu0 %v743, 108
      %v748 = vpop.permute.xlu0 %747
      %749 = vrot.lane.b32.xlu0 %v744, 108
      %v750 = vpop.permute.xlu0 %749
      %v751 = vrot.slane %v748, 4
      %v752 = vrot.slane %v750, 4
      %v753 = vsel %vm240, %v751, %v752
      %v754 = vsel %vm314, %v748, %v753
      %v755 = vsel %vm314, %v750, %v752
      %758 = vst [vmem:[#allocation2 + $0x3c] sm:$0xff] %v754
      %759 = vst [vmem:[#allocation2 + $0x44] sm:$0xf] %v755
      %v760 = vld [vmem:[#allocation3] sm:$0xff]
      %v761 = vld [vmem:[#allocation3 + $0x8] sm:$0xff]
      %764 = vrot.lane.b32.xlu0 %v760, 92
      %v765 = vpop.permute.xlu0 %764
      %766 = vrot.lane.b32.xlu0 %v761, 92
      %v767 = vpop.permute.xlu0 %766
      %v768 = vrot.slane %v765, 4
      %v769 = vrot.slane %v767, 4
      %v770 = vsel %vm240, %v768, %v769
      %v771 = vsel %vm332, %v765, %v770
      %v772 = vsel %vm332, %v767, %v769
      %775 = vst [vmem:[#allocation2 + $0x48] sm:$0xff] %v771
      %776 = vst [vmem:[#allocation2 + $0x50] sm:$0xf] %v772
      %v777 = vld [vmem:[#allocation3] sm:$0xff]
      %v778 = vld [vmem:[#allocation3 + $0x8] sm:$0xff]
      %781 = vrot.lane.b32.xlu0 %v777, 91
      %v782 = vpop.permute.xlu0 %781
      %783 = vrot.lane.b32.xlu0 %v778, 91
      %v784 = vpop.permute.xlu0 %783
      %v785 = vrot.slane %v782, 4
      %v786 = vrot.slane %v784, 4
      %v787 = vsel %vm240, %v785, %v786
      %v788 = vsel %vm350, %v782, %v787
      %v789 = vsel %vm350, %v784, %v786
      %792 = vst [vmem:[#allocation2 + $0x54] sm:$0xff] %v788
      %793 = vst [vmem:[#allocation2 + $0x5c] sm:$0xf] %v789
      %v794 = vld [vmem:[#allocation3] sm:$0xff]
      %v795 = vld [vmem:[#allocation3 + $0x8] sm:$0xff]
      %798 = vrot.lane.b32.xlu0 %v794, 90
      %v799 = vpop.permute.xlu0 %798
      %800 = vrot.lane.b32.xlu0 %v795, 90
      %v801 = vpop.permute.xlu0 %800
      %v802 = vrot.slane %v799, 4
      %v803 = vrot.slane %v801, 4
      %v804 = vsel %vm240, %v802, %v803
      %v805 = vsel %vm368, %v799, %v804
      %v806 = vsel %vm368, %v801, %v803
      %809 = vst [vmem:[#allocation2 + $0x60] sm:$0xff] %v805
      %810 = vst [vmem:[#allocation2 + $0x68] sm:$0xf] %v806
      %v811 = vld [vmem:[%s3] sm:$0xf]
      %v812 = vld [vmem:[#allocation2] sm:$0xff]
      %v813 = vld [vmem:[#allocation2 + $0x8] sm:$0xf]
      %v814 = vld [vmem:[#allocation2 + $0xc] sm:$0xff]
      %v815 = vld [vmem:[#allocation2 + $0x14] sm:$0xf]
      %v816 = vld [vmem:[#allocation2 + $0x18] sm:$0xff]
      %v817 = vld [vmem:[#allocation2 + $0x20] sm:$0xf]
      %v818 = vld [vmem:[#allocation2 + $0x24] sm:$0xff]
      %v819 = vld [vmem:[#allocation2 + $0x2c] sm:$0xf]
      %v820 = vld [vmem:[#allocation2 + $0x30] sm:$0xff]
      %v821 = vld [vmem:[#allocation2 + $0x38] sm:$0xf]
      %v822 = vld [vmem:[#allocation2 + $0x3c] sm:$0xff]
      %v823 = vld [vmem:[#allocation2 + $0x44] sm:$0xf]
      %v824 = vld [vmem:[#allocation2 + $0x48] sm:$0xff]
      %v825 = vld [vmem:[#allocation2 + $0x50] sm:$0xf]
      %v826 = vld [vmem:[#allocation2 + $0x54] sm:$0xff]
      %v827 = vld [vmem:[#allocation2 + $0x5c] sm:$0xf]
      %v828 = vld [vmem:[#allocation2 + $0x60] sm:$0xff]
      %v829 = vld [vmem:[#allocation2 + $0x68] sm:$0xf]
      %v830 = vld [vmem:[%s4] sm:$0xff]
      %832 = vset.pattern.permute.xlu0 0
      %833 = vperm.xlu0 %832, %v830
      %v834 = vpop.permute.xlu0 %833
      %v854 = vunpack.c.l.b16 %v812
      %v855 = vunpack.c.h.b16 %v812
      %v856 = vunpack.c.l.b16 %v813
      %v857 = vunpack.c.l.b16 %v814
      %v858 = vunpack.c.h.b16 %v814
      %v859 = vunpack.c.l.b16 %v815
      %v860 = vunpack.c.l.b16 %v816
      %v861 = vunpack.c.h.b16 %v816
      %v862 = vunpack.c.l.b16 %v817
      %v863 = vunpack.c.l.b16 %v818
      %v864 = vunpack.c.h.b16 %v818
      %v865 = vunpack.c.l.b16 %v819
      %v866 = vunpack.c.l.b16 %v820
      %v867 = vunpack.c.h.b16 %v820
      %v868 = vunpack.c.l.b16 %v821
      %v869 = vunpack.c.l.b16 %v822
      %v870 = vunpack.c.h.b16 %v822
      %v871 = vunpack.c.l.b16 %v823
      %v872 = vunpack.c.l.b16 %v824
      %v873 = vunpack.c.h.b16 %v824
      %v874 = vunpack.c.l.b16 %v825
      %v875 = vunpack.c.l.b16 %v826
      %v876 = vunpack.c.h.b16 %v826
      %v877 = vunpack.c.l.b16 %v827
      %v878 = vunpack.c.l.b16 %v828
      %v879 = vunpack.c.h.b16 %v828
      %v880 = vunpack.c.l.b16 %v829
      %v881 = vpack.c.b16 %v857, %v854
      %v882 = vpack.c.b16 %v858, %v855
      %v883 = vpack.c.b16 %v859, %v856
      %v884 = vpack.c.b16 %v863, %v860
      %v885 = vpack.c.b16 %v864, %v861
      %v886 = vpack.c.b16 %v865, %v862
      %v887 = vpack.c.b16 %v869, %v866
      %v888 = vpack.c.b16 %v870, %v867
      %v889 = vpack.c.b16 %v871, %v868
      %v890 = vpack.c.b16 %v875, %v872
      %v891 = vpack.c.b16 %v876, %v873
      %v892 = vpack.c.b16 %v877, %v874
      %v893 = vpack.c.b16 %v878, %v878
      %v894 = vpack.c.b16 %v879, %v879
      %v895 = vpack.c.b16 %v880, %v880
      %v909 = vsel %vm472, %v811, 0
      %v912 = vsel %vm476, %v893, 0
      %v915 = vsel %vm476, %v894, 0
      %v918 = vsel %vm476, %v895, 0
      %920 = vmatpush.bf16.msra.mxu0 0
      %921 = vmatpush.bf16.msra.mxu0 0
      %922 = vmatpush.bf16.msra.mxu0 0
      %923 = vmatpush.bf16.msra.mxu0 %v912
      %924 = vmatpush.bf16.msra.mxu0 %v890
      %925 = vmatpush.bf16.msra.mxu0 %v887
      %926 = vmatpush.bf16.msra.mxu0 %v884
      %927 = vmatpush.bf16.msra.mxu0 %v881
      %928 = vmatmul.bf16.gmra.mxu0 %v909
      %v929 = vpop.f32.mrf.mxu0
      %v930 = vadd.f32 %v834, %v929
      %v931 = vpop.f32.mrf.mxu0
      %932 = vdwg.mxu0
      %933 = vmatpush.bf16.msra.mxu0 0
      %934 = vmatpush.bf16.msra.mxu0 0
      %935 = vmatpush.bf16.msra.mxu0 0
      %936 = vmatpush.bf16.msra.mxu0 %v915
      %937 = vmatpush.bf16.msra.mxu0 %v891
      %938 = vmatpush.bf16.msra.mxu0 %v888
      %939 = vmatpush.bf16.msra.mxu0 %v885
      %940 = vmatpush.bf16.msra.mxu0 %v882
      %941 = vmatmul.bf16.gmra.mxu0 %v909
      %v942 = vpop.f32.mrf.mxu0
      %v943 = vadd.f32 %v834, %v942
      %v944 = vpop.f32.mrf.mxu0
      %945 = vdwg.mxu0
      %946 = vmatpush.bf16.msra.mxu0 0
      %947 = vmatpush.bf16.msra.mxu0 0
      %948 = vmatpush.bf16.msra.mxu0 0
      %949 = vmatpush.bf16.msra.mxu0 %v918
      %950 = vmatpush.bf16.msra.mxu0 %v892
      %951 = vmatpush.bf16.msra.mxu0 %v889
      %952 = vmatpush.bf16.msra.mxu0 %v886
      %953 = vmatpush.bf16.msra.mxu0 %v883
      %954 = vmatmul.bf16.gmra.mxu0 %v909
      %v955 = vpop.f32.mrf.mxu0
      %v956 = vadd.f32 %v834, %v955
      %v957 = vpop.f32.mrf.mxu0
      %958 = vdwg.mxu0
      %v959 = vld [vmem:[%s219] sm:$0xff]
      %v960 = vld [vmem:[%s219 + $0x8] sm:$0xff]
      %v961 = vunpack.c.l.bf16 %v959
      %v962 = vunpack.c.h.bf16 %v959
      %v963 = vunpack.c.l.bf16 %v960
      %v964 = vunpack.c.h.bf16 %v960
      %969 = vrot.lane.b32.xlu0 %v961, 109
      %v970 = vpop.permute.xlu0 %969
      %971 = vrot.lane.b32.xlu0 %v962, 109
      %v972 = vpop.permute.xlu0 %971
      %973 = vrot.lane.b32.xlu0 %v963, 109
      %v974 = vpop.permute.xlu0 %973
      %975 = vrot.lane.b32.xlu0 %v964, 109
      %v976 = vpop.permute.xlu0 %975
      %vm977 = vcmask 891904
      %v978 = vsel %vm977, %v970, %v972
      %v979 = vsel %vm977, %v972, %v974
      %v980 = vsel %vm977, %v974, %v976
      %v984 = vadd.f32 %v930, %v978
      %v985 = vadd.f32 %v943, %v979
      %v986 = vadd.f32 %v956, %v980
      %v987 = vmax.f32 %v984, 0.0
      %v988 = vmax.f32 %v985, 0.0
      %v989 = vmax.f32 %v986, 0.0
      %990 = vst [vmem:[%s224] sm:$0xff] %v987
      %991 = vst [vmem:[%s224 + $0x8] sm:$0xff] %v988
      %992 = vst [vmem:[%s224 + $0x10] sm:$0xff] %v989
      %p993 = scmp.lt.s32.totalorder %s16, 1
      %s994 = scalar_select %p993, %s16, 1
      %s995 = smul.addr %s994, 3
      %s996 = smul.addr %s995, 8
      %s997 = scalar_lea.vmem %s5, %s996
      // Predicated region
      $region41: #{basic_block_forward.1} parent=39 // pred_check
        %p998 = pneg %p144
      $region42: #{basic_block_forward.1} parent=39 // pred_check_branch
        %1000 = sbr.rel (%p998) target = $region44
      $region43: #{basic_block_forward.1} parent=39 // pred_region
        _
      $region44: #{basic_block_forward.1} parent=39 // pred_fallthru
        _
    $region40: #{basic_block_forward.1} parent=5 // pred_fallthru
      _
    %p1001 = scmp.le.s32.totalorder 2, %s11
    // Predicated region
    $region45: #{basic_block_forward.1} parent=5 // pred_check
      %p1002 = pneg %p1001
    $region46: #{basic_block_forward.1} parent=5 // pred_check_branch
      %1004 = sbr.rel (%p1002) target = $region48
    $region47: #{basic_block_forward.1} parent=5 // pred_region
      %s1005 = ssub.s32 %s11, 2
      // Predicated region
      $region49: #{basic_block_forward.1} parent=47 // pred_check
        %p1006 = pneg %p150
      $region50: #{basic_block_forward.1} parent=47 // pred_check_branch
        %1008 = sbr.rel (%p1006) target = $region52
      $region51: #{basic_block_forward.1} parent=47 // pred_region
        %p1009 = scmp.lt.s32.totalorder %s17, 1
        %s1010 = scalar_select %p1009, %s17, 1
        %s1011 = smul.addr %s1010, 3
        %s1012 = smul.addr %s1011, 8
        %s1013 = scalar_lea.vmem %s5, %s1012
      $region52: #{basic_block_forward.1} parent=47 // pred_fallthru
        _
    $region48: #{basic_block_forward.1} parent=5 // pred_fallthru
      _
  $region6: #{basic_block_forward.1} parent=0 // loop_footer
    %s15 = sadd.s32 1, %s11
  $region7: #{basic_block_forward.1} parent=0 // loop_footer_branch
    %10 = sbr.rel target = $region3
  $region8: #{basic_block_forward.1} parent=0 // loop_exit
    _

</llo_original>
